<compile_context>
chip_gen: v5e
topology: v5e:2x2
jax: 0.10.0
libtpu: 0.0.40
codegen_flags: <defaults>
</compile_context>

<pallas_src>
import functools

import jax
import jax.numpy as jnp
from jax import lax
from jax.experimental import pallas as pl
from jax.experimental.pallas import tpu as pltpu

EPS = 1e-5  # nn.GroupNorm default


def _round_up(n, m):
    return ((n + m - 1) // m) * m


def _vmem_budget_bytes():
    """Per-generation scoped-VMEM budget.

    v5e/v6e: 128 MiB physical VMEM; v7x: 64 MiB per TensorCore.  Use ~half of
    physical (headroom for Mosaic internals), capped at 96 MiB; fall back to a
    conservative 32 MiB if the query is unavailable.
    """
    try:
        phys = int(pltpu.get_tpu_info().vmem_capacity_bytes)
        return int(min(phys // 2, 96 * 1024 * 1024))
    except Exception:
        return 32 * 1024 * 1024


def _choose_tile(n, per_row_bytes, fixed_bytes, budget):
    """Return (row tile of the H2*W2 axis, zero-padded row count).

    Single-tile samples round rows up to a multiple of 16 (bf16 sublane
    packing).  Multi-tile samples use a multiple of 128 rows so the phase-2
    NCHW output block (1, OC, tn) stays lane-dense / layout-legal.  Zero rows
    produce zero conv output (no bias), so GroupNorm stats stay exact when
    divided by the true element count N*OC.
    """
    avail = max(budget - fixed_bytes, 0)
    max_rows = max(avail // max(per_row_bytes, 1), 16)
    if n <= max_rows:
        tn = _round_up(n, 16)
        return tn, tn
    tn = min(max((max_rows // 128) * 128, 128), 1024)
    return tn, _round_up(n, tn)


# ---------------- phase 1: 1x1 conv matmul + single-pass statistics ----------
def _mm_stats_kernel(xm_ref, w_ref, y_ref, sum_ref, ssq_ref):
    # xm_ref : (1, tn, 4C)   merged-patch activations (channels-last tile)
    # w_ref  : (4C, OCp)     permuted + zero-padded 1x1 conv weight
    # y_ref  : (1, tn, OCp)  raw conv output tile (stored in y_dtype, bf16 default)
    # sum_ref: (1, 1, OCp)   per-sample column sum       (resident f32 accumulator)
    # ssq_ref: (1, 1, OCp)   per-sample column sum-of-sq (resident f32 accumulator)
    @pl.when(pl.program_id(1) == 0)
    def _():
        sum_ref[...] = jnp.zeros_like(sum_ref)
        ssq_ref[...] = jnp.zeros_like(ssq_ref)

    y = jnp.dot(xm_ref[0], w_ref[...], preferred_element_type=jnp.float32)
    y_ref[0] = y.astype(y_ref.dtype)                       # cast AFTER stats source
    sum_ref[0] = sum_ref[0] + jnp.sum(y, axis=0, keepdims=True)
    ssq_ref[0] = ssq_ref[0] + jnp.sum(y * y, axis=0, keepdims=True)


# ---------------- phase 2: normalize + affine + transpose to NCHW ------------
def _affine_nchw_kernel(y_ref, scale_ref, shift_ref, o_ref, *, oc):
    # y_ref    : (1, tn, OCp)
    # scale_ref: (1, 1, OCp)   gamma * rsqrt(var+eps)          (per sample)
    # shift_ref: (1, 1, OCp)   beta  - mean * gamma * rsqrt(.) (per sample)
    # o_ref    : (1, OC, tn)   NCHW-flattened output tile
    y = y_ref[0].astype(jnp.float32)                        # (tn, OCp)
    z = y * scale_ref[0] + shift_ref[0]                     # (tn, OCp)
    zt = jnp.transpose(z)                                   # (OCp, tn)  XLU (idle otherwise)
    o_ref[0] = zt[:oc, :].astype(o_ref.dtype)               # drop channel pad, store NCHW


def patch_merging_pallas(x, conv_w, gamma, beta, *, compute_dtype=None,
                         y_dtype=jnp.bfloat16):
    """x: (B, C, H, W); conv_w: (OC, 4C, 1, 1); gamma/beta: (OC,).

    compute_dtype: dtype of the MXU matmul inputs (xm / weight).  bf16 is
      recommended on ALL generations (v5e/v6e/v7x): the kernel is HBM-bound,
      bf16 halves xm traffic, and GroupNorm statistics stay in f32 either way.
    y_dtype: storage dtype of the conv intermediate round-tripped between the
      two phases.  Default bf16 (stats come from the f32 accumulator before the
      cast, so normalization statistics are unchanged; output deviates ~1e-3).
      Pass jnp.float32 for a bit-faithful path.
    """
    B, C, H, W = x.shape
    assert H % 2 == 0 and W % 2 == 0, "PatchMerging requires even H and W"
    OC = conv_w.shape[0]
    H2, W2 = H // 2, W // 2
    N = H2 * W2
    C4 = 4 * C
    OCp = _round_up(OC, 128)            # lane-dense kernel-internal channel dim
    if compute_dtype is None:
        compute_dtype = x.dtype

    xm_bytes = jnp.dtype(compute_dtype).itemsize
    y_bytes = jnp.dtype(y_dtype).itemsize
    out_bytes = jnp.dtype(x.dtype).itemsize
    budget = _vmem_budget_bytes()
    per_row = max(2 * (C4 * xm_bytes + OCp * y_bytes),      # phase 1 (dbl-buffered)
                  2 * (OCp * y_bytes + OC * out_bytes))     # phase 2 (dbl-buffered)
    fixed = 2 * C4 * OCp * xm_bytes + 4 * OCp * 4 + (1 << 20)
    tn, Npad = _choose_tile(N, per_row, fixed, budget)
    num_tiles = Npad // tn

    # --- glue: ONE transpose copy NCHW -> (B, N, 4C), channels-last.
    # TODO(synk): remaining HBM headroom is doing this space-to-depth with
    # strided DMAs inside phase 1 instead of an XLA copy.
    xm = jnp.transpose(x.reshape(B, C, H2, 2, W2, 2),
                       (0, 2, 4, 3, 5, 1)).reshape(B, N, C4)
    xm = xm.astype(compute_dtype)
    if Npad != N:
        xm = jnp.pad(xm, ((0, 0), (0, Npad - N), (0, 0)))   # zero rows: stats-safe

    # --- fold the PyTorch quadrant-concat ordering [x0,x1,x2,x3] into the
    #     1x1-conv weight (trace time, free).  xm feature ordering is (dh,dw,c).
    perm = jnp.concatenate([
        jnp.arange(0 * C, 1 * C),       # (dh=0, dw=0)  -> torch x0
        jnp.arange(2 * C, 3 * C),       # (dh=0, dw=1)  -> torch x2
        jnp.arange(1 * C, 2 * C),       # (dh=1, dw=0)  -> torch x1
        jnp.arange(3 * C, 4 * C),       # (dh=1, dw=1)  -> torch x3
    ])
    w2 = conv_w[:, :, 0, 0][:, perm].T                       # (4C, OC)
    w2 = jnp.pad(w2, ((0, 0), (0, OCp - OC))).astype(compute_dtype)

    # --- phase 1: matmul + single-pass statistics ----------------------------
    y, col_sum, col_ssq = pl.pallas_call(
        _mm_stats_kernel,
        out_shape=(jax.ShapeDtypeStruct((B, Npad, OCp), y_dtype),
                   jax.ShapeDtypeStruct((B, 1, OCp), jnp.float32),
                   jax.ShapeDtypeStruct((B, 1, OCp), jnp.float32)),
        grid_spec=pltpu.PrefetchScalarGridSpec(
            num_scalar_prefetch=0,
            grid=(B, num_tiles),
            in_specs=[
                pl.BlockSpec((1, tn, C4), lambda b, t: (b, t, 0)),
                pl.BlockSpec((C4, OCp), lambda b, t: (0, 0)),   # constant weight
            ],
            out_specs=(
                pl.BlockSpec((1, tn, OCp), lambda b, t: (b, t, 0)),
                pl.BlockSpec((1, 1, OCp), lambda b, t: (b, 0, 0)),  # resident acc
                pl.BlockSpec((1, 1, OCp), lambda b, t: (b, 0, 0)),  # resident acc
            ),
        ),
        compiler_params=pltpu.CompilerParams(
            dimension_semantics=("parallel", "arbitrary"),
            vmem_limit_bytes=budget),
    )(xm, w2)

    # --- tiny per-sample GroupNorm(1, OC) statistics.  Padded channels and
    #     padded rows contribute exactly zero, so dividing by the TRUE element
    #     count N*OC gives exact statistics.
    count = float(N * OC)
    sum_y = jnp.sum(col_sum[:, 0, :], axis=-1)                # (B,)
    ssq_y = jnp.sum(col_ssq[:, 0, :], axis=-1)                # (B,)
    mean = sum_y / count
    var = jnp.maximum(ssq_y / count - mean * mean, 0.0)       # biased, like GN
    inv = lax.rsqrt(var + EPS)

    gamma_p = jnp.pad(gamma.astype(jnp.float32), (0, OCp - OC))
    beta_p = jnp.pad(beta.astype(jnp.float32), (0, OCp - OC))
    scale = (gamma_p[None, :] * inv[:, None]).reshape(B, 1, OCp)
    shift = (beta_p[None, :] - mean[:, None] * gamma_p[None, :] * inv[:, None]
             ).reshape(B, 1, OCp)

    # --- phase 2: normalize + affine, emitting NCHW directly -----------------
    out = pl.pallas_call(
        functools.partial(_affine_nchw_kernel, oc=OC),
        out_shape=jax.ShapeDtypeStruct((B, OC, Npad), x.dtype),
        grid_spec=pltpu.PrefetchScalarGridSpec(
            num_scalar_prefetch=0,
            grid=(B, num_tiles),
            in_specs=[
                pl.BlockSpec((1, tn, OCp), lambda b, t: (b, t, 0)),
                pl.BlockSpec((1, 1, OCp), lambda b, t: (b, 0, 0)),
                pl.BlockSpec((1, 1, OCp), lambda b, t: (b, 0, 0)),
            ],
            out_specs=pl.BlockSpec((1, OC, tn), lambda b, t: (b, 0, t)),
        ),
        compiler_params=pltpu.CompilerParams(
            dimension_semantics=("parallel", "parallel"),
            vmem_limit_bytes=budget),
    )(y, scale, shift)

    if Npad != N:
        out = out[:, :, :N]
    return out.reshape(B, OC, H2, W2)      # free reshape when Npad == N


def patch_merging_ref(x, conv_w, gamma, beta):
    """Pure-JAX reference mirroring the PyTorch forward."""
    x0 = x[:, :, 0::2, 0::2]
    x1 = x[:, :, 1::2, 0::2]
    x2 = x[:, :, 0::2, 1::2]
    x3 = x[:, :, 1::2, 1::2]
    xcat = jnp.concatenate([x0, x1, x2, x3], axis=1)           # (B, 4C, H2, W2)
    y = jnp.einsum("bihw,oi->bohw", xcat, conv_w[:, :, 0, 0])  # 1x1 conv, no bias
    mean = jnp.mean(y, axis=(1, 2, 3), keepdims=True)          # GroupNorm(1, OC)
    var = jnp.mean(jnp.square(y - mean), axis=(1, 2, 3), keepdims=True)
    yn = (y - mean) * lax.rsqrt(var + EPS)
    return yn * gamma[None, :, None, None] + beta[None, :, None, None]


if __name__ == "__main__":
    key = jax.random.PRNGKey(0)
    B, C, H, W = 2, 4, 16, 16
    OC = 2 * C            # out_channels default: in_channels * 2
    C4 = 4 * C            # scale_factor**2 * in_channels

    kx, kw = jax.random.split(key)
    x = jax.random.normal(kx, (B, C, H, W), dtype=jnp.float32)
    conv_w = (jax.random.normal(kw, (OC, C4, 1, 1), dtype=jnp.float32)
              * (1.0 / jnp.sqrt(C4)))
    gamma = jnp.ones((OC,), dtype=jnp.float32)
    beta = jnp.zeros((OC,), dtype=jnp.float32)

    ref = patch_merging_ref(x, conv_w, gamma, beta)

    # 1) bit-faithful path: f32 matmul, f32 y round-trip (tight tolerance)
    out_exact = jax.block_until_ready(
        patch_merging_pallas(x, conv_w, gamma, beta, y_dtype=jnp.float32))
    assert out_exact.shape == (B, OC, H // 2, W // 2)
    assert jnp.allclose(out_exact, ref, atol=1e-4, rtol=1e-4), "f32 path mismatch"

    # 2) default path: f32 matmul + stats, bf16 y intermediate (documented ~1e-3 drift)
    out_default = jax.block_until_ready(
        patch_merging_pallas(x, conv_w, gamma, beta))
    assert out_default.shape == (B, OC, H // 2, W // 2)
    assert jnp.allclose(out_default, ref, atol=3e-2, rtol=3e-2), "bf16-y path mismatch"

    # 3) full bf16 compute path (recommended on v5e/v6e/v7x — HBM-bound kernel)
    out_bf16 = jax.block_until_ready(
        patch_merging_pallas(x, conv_w, gamma, beta, compute_dtype=jnp.bfloat16))
    assert out_bf16.shape == (B, OC, H // 2, W // 2)
    assert jnp.allclose(out_bf16, ref, atol=1.5e-1, rtol=1.5e-1), "bf16 path mismatch"

    print("KERNEL_OK")
</pallas_src>

<mosaic_0001>
module attributes {stable_mosaic.version = 11 : i64} {
  func.func @_mm_stats_kernel(%arg0: i32, %arg1: i32, %arg2: memref<1x64x16xf32, #tpu.memory_space<vmem>>, %arg3: memref<16x128xf32, #tpu.memory_space<vmem>>, %arg4: memref<1x64x128xf32, #tpu.memory_space<vmem>>, %arg5: memref<1x1x128xf32, #tpu.memory_space<vmem>>, %arg6: memref<1x1x128xf32, #tpu.memory_space<vmem>>) attributes {dimension_semantics = [#tpu.dimension_semantics<parallel>, #tpu.dimension_semantics<arbitrary>], iteration_bounds = array<i64: 2, 1>, scalar_prefetch = 0 : i64, scratch_operands = 0 : i64, tpu.core_type = #tpu.core_type<tc>, window_params = [{transform_indices = @transform_0, window_bounds = array<i64: 1, 64, 16>}, {pipeline_mode = #tpu.pipeline_mode<synchronous>, transform_indices = @transform_1, window_bounds = array<i64: 16, 128>}, {transform_indices = @transform_2, window_bounds = array<i64: 1, 64, 128>}, {transform_indices = @transform_3, window_bounds = array<i64: 1, 1, 128>}, {transform_indices = @transform_4, window_bounds = array<i64: 1, 1, 128>}]} {
    %c0_i32 = arith.constant 0 : i32
    %0 = arith.cmpi eq, %arg1, %c0_i32 : i32
    %1 = arith.extui %0 : i1 to i32
    %c0_i32_0 = arith.constant 0 : i32
    %2 = arith.cmpi ne, %1, %c0_i32_0 : i32
    scf.if %2 {
      %cst_22 = arith.constant 0.000000e+00 : f32
      %27 = vector.broadcast %cst_22 : f32 to vector<1x1x128xf32>
      %c0_23 = arith.constant 0 : index
      %c0_24 = arith.constant 0 : index
      %c0_25 = arith.constant 0 : index
      %28 = vector.load %arg5[%c0_23, %c0_24, %c0_25] : memref<1x1x128xf32, #tpu.memory_space<vmem>>, vector<1x1x128xf32>
      tpu.vector_store %arg5[%c0_23, %c0_24, %c0_25], %27 {strides = array<i32>} : memref<1x1x128xf32, #tpu.memory_space<vmem>>, vector<1x1x128xf32>,
      %cst_26 = arith.constant 0.000000e+00 : f32
      %29 = vector.broadcast %cst_26 : f32 to vector<1x1x128xf32>
      %c0_27 = arith.constant 0 : index
      %c0_28 = arith.constant 0 : index
      %c0_29 = arith.constant 0 : index
      %30 = vector.load %arg6[%c0_27, %c0_28, %c0_29] : memref<1x1x128xf32, #tpu.memory_space<vmem>>, vector<1x1x128xf32>
      tpu.vector_store %arg6[%c0_27, %c0_28, %c0_29], %29 {strides = array<i32>} : memref<1x1x128xf32, #tpu.memory_space<vmem>>, vector<1x1x128xf32>,
    } else {
    }
    %c0 = arith.constant 0 : index
    %c0_1 = arith.constant 0 : index
    %c0_2 = arith.constant 0 : index
    %3 = vector.load %arg2[%c0, %c0_1, %c0_2] : memref<1x64x16xf32, #tpu.memory_space<vmem>>, vector<1x64x16xf32>
    %4 = vector.shape_cast %3 : vector<1x64x16xf32> to vector<64x16xf32>
    %c0_3 = arith.constant 0 : index
    %c0_4 = arith.constant 0 : index
    %5 = vector.load %arg3[%c0_3, %c0_4] : memref<16x128xf32, #tpu.memory_space<vmem>>, vector<16x128xf32>
    %cst = arith.constant dense<0.000000e+00> : vector<64x128xf32>
    %6 = tpu.matmul %4, %5, %cst {dimension_numbers = #tpu.dot_dimension_numbers<[1], [0], [0], [1], [0, 0, 1, 1], [], []>} : vector<64x16xf32>, vector<16x128xf32>, vector<64x128xf32> -> vector<64x128xf32>
    %c0_5 = arith.constant 0 : index
    %c0_6 = arith.constant 0 : index
    %c0_7 = arith.constant 0 : index
    %7 = vector.load %arg4[%c0_5, %c0_6, %c0_7] : memref<1x64x128xf32, #tpu.memory_space<vmem>>, vector<1x64x128xf32>
    %8 = vector.shape_cast %7 : vector<1x64x128xf32> to vector<64x128xf32>
    %9 = vector.shape_cast %6 : vector<64x128xf32> to vector<1x64x128xf32>
    tpu.vector_store %arg4[%c0_5, %c0_6, %c0_7], %9 {strides = array<i32>} : memref<1x64x128xf32, #tpu.memory_space<vmem>>, vector<1x64x128xf32>,
    %c0_8 = arith.constant 0 : index
    %c0_9 = arith.constant 0 : index
    %c0_10 = arith.constant 0 : index
    %10 = vector.load %arg5[%c0_8, %c0_9, %c0_10] : memref<1x1x128xf32, #tpu.memory_space<vmem>>, vector<1x1x128xf32>
    %11 = vector.shape_cast %10 : vector<1x1x128xf32> to vector<1x128xf32>
    %cst_11 = arith.constant dense<0.000000e+00> : vector<128xf32>
    %12 = vector.multi_reduction <add>, %6, %cst_11 [0] : vector<64x128xf32> to vector<128xf32>
    %13 = vector.shape_cast %12 : vector<128xf32> to vector<1x128xf32>
    %14 = arith.addf %11, %13 : vector<1x128xf32>
    %c0_12 = arith.constant 0 : index
    %c0_13 = arith.constant 0 : index
    %c0_14 = arith.constant 0 : index
    %15 = vector.load %arg5[%c0_12, %c0_13, %c0_14] : memref<1x1x128xf32, #tpu.memory_space<vmem>>, vector<1x1x128xf32>
    %16 = vector.shape_cast %15 : vector<1x1x128xf32> to vector<1x128xf32>
    %17 = vector.shape_cast %14 : vector<1x128xf32> to vector<1x1x128xf32>
    tpu.vector_store %arg5[%c0_12, %c0_13, %c0_14], %17 {strides = array<i32>} : memref<1x1x128xf32, #tpu.memory_space<vmem>>, vector<1x1x128xf32>,
    %c0_15 = arith.constant 0 : index
    %c0_16 = arith.constant 0 : index
    %c0_17 = arith.constant 0 : index
    %18 = vector.load %arg6[%c0_15, %c0_16, %c0_17] : memref<1x1x128xf32, #tpu.memory_space<vmem>>, vector<1x1x128xf32>
    %19 = vector.shape_cast %18 : vector<1x1x128xf32> to vector<1x128xf32>
    %20 = arith.mulf %6, %6 : vector<64x128xf32>
    %cst_18 = arith.constant dense<0.000000e+00> : vector<128xf32>
    %21 = vector.multi_reduction <add>, %20, %cst_18 [0] : vector<64x128xf32> to vector<128xf32>
    %22 = vector.shape_cast %21 : vector<128xf32> to vector<1x128xf32>
    %23 = arith.addf %19, %22 : vector<1x128xf32>
    %c0_19 = arith.constant 0 : index
    %c0_20 = arith.constant 0 : index
    %c0_21 = arith.constant 0 : index
    %24 = vector.load %arg6[%c0_19, %c0_20, %c0_21] : memref<1x1x128xf32, #tpu.memory_space<vmem>>, vector<1x1x128xf32>
    %25 = vector.shape_cast %24 : vector<1x1x128xf32> to vector<1x128xf32>
    %26 = vector.shape_cast %23 : vector<1x128xf32> to vector<1x1x128xf32>
    tpu.vector_store %arg6[%c0_19, %c0_20, %c0_21], %26 {strides = array<i32>} : memref<1x1x128xf32, #tpu.memory_space<vmem>>, vector<1x1x128xf32>,
    return
  }
  func.func @transform_0(%arg0: i32, %arg1: i32) -> (i32, i32, i32) {
    %c0_i32 = arith.constant 0 : i32
    %c0_i32_0 = arith.constant 0 : i32
    return %arg0, %arg1, %c0_i32 : i32, i32, i32
  }
  func.func @transform_1(%arg0: i32, %arg1: i32) -> (i32, i32) {
    %c0_i32 = arith.constant 0 : i32
    %c0_i32_0 = arith.constant 0 : i32
    %c0_i32_1 = arith.constant 0 : i32
    return %c0_i32, %c0_i32_0 : i32, i32
  }
  func.func @transform_2(%arg0: i32, %arg1: i32) -> (i32, i32, i32) {
    %c0_i32 = arith.constant 0 : i32
    %c0_i32_0 = arith.constant 0 : i32
    return %arg0, %arg1, %c0_i32 : i32, i32, i32
  }
  func.func @transform_3(%arg0: i32, %arg1: i32) -> (i32, i32, i32) {
    %c0_i32 = arith.constant 0 : i32
    %c0_i32_0 = arith.constant 0 : i32
    %c0_i32_1 = arith.constant 0 : i32
    return %arg0, %c0_i32, %c0_i32_0 : i32, i32, i32
  }
  func.func @transform_4(%arg0: i32, %arg1: i32) -> (i32, i32, i32) {
    %c0_i32 = arith.constant 0 : i32
    %c0_i32_0 = arith.constant 0 : i32
    %c0_i32_1 = arith.constant 0 : i32
    return %arg0, %c0_i32, %c0_i32_0 : i32, i32, i32
  }
}

</mosaic_0001>

<llo_original>
// kernel: tpu_custom_call.1
$region0: #{tpu_custom_call.1}
  #allocation0 [shape = 'u32[]', space=smem, size = 0x4, offset = 0x4, fixed_abs, tag = 'smem constant byte address 0x4 - core index']
  #allocation1 [shape = 'u32[72,128]{1,0:T(1,128)}', space=vmem, size = 0x9000, scoped, tag = 'internal scratch']
  %s0 = inlined_call_operand.vmem [shape: f32[2,64,16], index: 0, kind: input, shape index: {}]
  %s1 = inlined_call_operand.vmem [shape: f32[16,128], index: 1, kind: input, shape index: {}]
  %s2 = inlined_call_operand.hbm [shape: f32[2,64,128], index: 2, kind: output, shape index: {0}]
  %s3 = inlined_call_operand.hbm [shape: f32[2,1,128], index: 3, kind: output, shape index: {1}]
  %s4 = inlined_call_operand.hbm [shape: f32[2,1,128], index: 4, kind: output, shape index: {2}]
  %5 = xla_tuple %s2, %s3, %s4
  %s6 = sld [smem:[#allocation0]]
  $region61: #{tpu_custom_call.1} parent=0
    _
  %s8 = ssub.s32 1, %s6
  %s9 = scalar_select 0, %s8, %s6
  $region1: #{tpu_custom_call.1} parent=0
    #allocation2 [shape = 'u8[65536]{0}', space=vmem, size = 0x10000, scoped, tag = 'output window, operand 0']
    #allocation3 [shape = 's32[2]{0}', space=sflag, size = 0x8, scoped, tag = 'scoped memory for tpu_custom_call.1']
    #allocation4 [shape = 'u8[1024]{0}', space=vmem, size = 0x400, scoped, tag = 'output window, operand 1']
    #allocation5 [shape = 's32[2]{0}', space=sflag, size = 0x8, scoped, tag = 'scoped memory for tpu_custom_call.1']
    #allocation6 [shape = 'u8[1024]{0}', space=vmem, size = 0x400, scoped, tag = 'output window, operand 2']
    %10 = vsyncpa [#allocation3], 0
    %s11 = scalar_lea.sflag [#allocation3], 1
    %12 = vsyncpa %s11, 0
    %13 = vsyncpa [#allocation5], 0
    %s14 = scalar_lea.sflag [#allocation5], 1
    %15 = vsyncpa %s14, 0
    loop: start=0, step=1, limit=4
    $region2: #{tpu_custom_call.1} parent=1 // loop_pre_header
      _
    $region3: #{tpu_custom_call.1} parent=1 // loop_header
      %s17 = sphi 0, %s21
      %p18 = scmp.ge.s32.totalorder %s17, 4
      %s24 = sphi 0, %s36
      %s25 = sphi 0, %s32
      %s26 = sphi 0, %s24
      %s27 = sphi 0, %s25
      %s28 = sphi 0, %s26
      %s29 = sphi 0, %s27
      %s41 = sphi 0, %s43
      %s44 = sphi 0, %s41
      %s45 = sphi 0, %s44
      %s61 = sphi 0, %s45
      %s65 = sphi 0, %s65
      %s67 = sphi 0, %s65
      %s68 = sphi 0, %s67
      %s82 = sphi 0, %s68
      %s90 = sphi 0, %s92
      %s93 = sphi 0, %s90
      %s94 = sphi 0, %s93
      %s110 = sphi 0, %s94
      %s116 = sphi 0, %s118
      %s119 = sphi 0, %s116
      %s120 = sphi 0, %s119
      %s136 = sphi 0, %s120
      %s142 = sphi 0, %s144
      %s145 = sphi 0, %s142
      %s146 = sphi 0, %s145
      %s162 = sphi 0, %s146
    $region4: #{tpu_custom_call.1} parent=1 // loop_header_branch
      %20 = sbr.rel (%p18) target = $region8
    $region5: #{tpu_custom_call.1} parent=1 // loop_body
      %s22 = ssub.s32 %s17, 1
      %s23 = ssub.s32 %s17, 2
      %s30 = sadd.s32 1, %s25
      %p31 = scmp.ge.s32.totalorder %s30, 1
      %s32 = scalar_select %p31, 0, %s30
      %s33 = sadd.s32 1, %s24
      %s34 = scalar_select %p31, %s33, %s24
      %p35 = scmp.ge.s32.totalorder %s34, 2
      %s36 = scalar_select %p35, 0, %s34
      %s37 = ssub.s32 %s24, %s36
      %s38 = ssub.s32 %s25, %s32
      %s39 = sor.u32 %s37, %s38
      %p40 = scmp.eq.s32.totalorder %s39, 0
      %s42 = sadd.s32 %s41, 1
      %s43 = scalar_select %p40, %s41, %s42
      %p46 = pneg %p40
      %p47 = scmp.eq.s32.totalorder %s17, 1
      %p48 = por %p46, %p47
      %p49 = scmp.ne.s32.totalorder %s41, %s44
      %p50 = scmp.eq.s32.totalorder %s17, 0
      %p51 = por %p49, %p50
      %p52 = scmp.ne.s32.totalorder %s41, %s44
      %p53 = scmp.eq.s32.totalorder %s22, 1
      %p54 = por %p52, %p53
      %p55 = scmp.ne.s32.totalorder %s44, %s45
      %p56 = scmp.eq.s32.totalorder %s22, 0
      %p57 = por %p55, %p56
      %p58 = scmp.ne.s32.totalorder %s44, %s45
      %p59 = scmp.eq.s32.totalorder %s23, 1
      %p60 = por %p58, %p59
      %p62 = scmp.ne.s32.totalorder %s45, %s61
      %p63 = scmp.eq.s32.totalorder %s23, 0
      %p64 = por %p62, %p63
      %s66 = sadd.s32 %s65, 1
      %p69 = scmp.eq.s32.totalorder %s17, 1
      %p70 = scmp.ne.s32.totalorder %s65, %s67
      %p71 = scmp.eq.s32.totalorder %s17, 0
      %p72 = por %p70, %p71
      %p73 = scmp.ne.s32.totalorder %s65, %s67
      %p74 = scmp.eq.s32.totalorder %s22, 1
      %p75 = por %p73, %p74
      %p76 = scmp.ne.s32.totalorder %s67, %s68
      %p77 = scmp.eq.s32.totalorder %s22, 0
      %p78 = por %p76, %p77
      %p79 = scmp.ne.s32.totalorder %s67, %s68
      %p80 = scmp.eq.s32.totalorder %s23, 1
      %p81 = por %p79, %p80
      %p83 = scmp.ne.s32.totalorder %s68, %s82
      %p84 = scmp.eq.s32.totalorder %s23, 0
      %p85 = por %p83, %p84
      %s86 = ssub.s32 %s24, %s36
      %s87 = ssub.s32 %s25, %s32
      %s88 = sor.u32 %s86, %s87
      %p89 = scmp.eq.s32.totalorder %s88, 0
      %s91 = sadd.s32 %s90, 1
      %s92 = scalar_select %p89, %s90, %s91
      %p95 = pneg %p89
      %p96 = scmp.eq.s32.totalorder %s17, 1
      %p97 = por %p95, %p96
      %p98 = scmp.ne.s32.totalorder %s90, %s93
      %p99 = scmp.eq.s32.totalorder %s17, 0
      %p100 = por %p98, %p99
      %p101 = scmp.ne.s32.totalorder %s90, %s93
      %p102 = scmp.eq.s32.totalorder %s22, 1
      %p103 = por %p101, %p102
      %p104 = scmp.ne.s32.totalorder %s93, %s94
      %p105 = scmp.eq.s32.totalorder %s22, 0
      %p106 = por %p104, %p105
      %p107 = scmp.ne.s32.totalorder %s93, %s94
      %p108 = scmp.eq.s32.totalorder %s23, 1
      %p109 = por %p107, %p108
      %p111 = scmp.ne.s32.totalorder %s94, %s110
      %p112 = scmp.eq.s32.totalorder %s23, 0
      %p113 = por %p111, %p112
      %s114 = ssub.s32 %s24, %s36
      %p115 = scmp.eq.s32.totalorder %s114, 0
      %s117 = sadd.s32 %s116, 1
      %s118 = scalar_select %p115, %s116, %s117
      %p121 = pneg %p115
      %p122 = scmp.eq.s32.totalorder %s17, 1
      %p123 = por %p121, %p122
      %p124 = scmp.ne.s32.totalorder %s116, %s119
      %p125 = scmp.eq.s32.totalorder %s17, 0
      %p126 = por %p124, %p125
      %p127 = scmp.ne.s32.totalorder %s116, %s119
      %p128 = scmp.eq.s32.totalorder %s22, 1
      %p129 = por %p127, %p128
      %p130 = scmp.ne.s32.totalorder %s119, %s120
      %p131 = scmp.eq.s32.totalorder %s22, 0
      %p132 = por %p130, %p131
      %p133 = scmp.ne.s32.totalorder %s119, %s120
      %p134 = scmp.eq.s32.totalorder %s23, 1
      %p135 = por %p133, %p134
      %p137 = scmp.ne.s32.totalorder %s120, %s136
      %p138 = scmp.eq.s32.totalorder %s23, 0
      %p139 = por %p137, %p138
      %s140 = ssub.s32 %s24, %s36
      %p141 = scmp.eq.s32.totalorder %s140, 0
      %s143 = sadd.s32 %s142, 1
      %s144 = scalar_select %p141, %s142, %s143
      %p147 = pneg %p141
      %p148 = scmp.eq.s32.totalorder %s17, 1
      %p149 = por %p147, %p148
      %p150 = scmp.ne.s32.totalorder %s142, %s145
      %p151 = scmp.eq.s32.totalorder %s17, 0
      %p152 = por %p150, %p151
      %p153 = scmp.ne.s32.totalorder %s142, %s145
      %p154 = scmp.eq.s32.totalorder %s22, 1
      %p155 = por %p153, %p154
      %p156 = scmp.ne.s32.totalorder %s145, %s146
      %p157 = scmp.eq.s32.totalorder %s22, 0
      %p158 = por %p156, %p157
      %p159 = scmp.ne.s32.totalorder %s145, %s146
      %p160 = scmp.eq.s32.totalorder %s23, 1
      %p161 = por %p159, %p160
      %p163 = scmp.ne.s32.totalorder %s146, %s162
      %p164 = scmp.eq.s32.totalorder %s23, 0
      %p165 = por %p163, %p164
      %p166 = scmp.le.s32.totalorder 1, %s17
      %p167 = scmp.lt.s32.totalorder %s17, 3
      %p168 = pnand %p166, %p167
      %p169 = pneg %p168
      // Predicated region
      $region9: #{tpu_custom_call.1} parent=5 // pred_check
        _
      $region10: #{tpu_custom_call.1} parent=5 // pred_check_branch
        %171 = sbr.rel (%p168) target = $region12
      $region11: #{tpu_custom_call.1} parent=5 // pred_region
        %s172 = ssub.s32 %s17, 1
        // Predicated region
        $region13: #{tpu_custom_call.1} parent=11 // pred_check
          %p173 = pneg %p78
        $region14: #{tpu_custom_call.1} parent=11 // pred_check_branch
          %175 = sbr.rel (%p173) target = $region16
        $region15: #{tpu_custom_call.1} parent=11 // pred_region
          _
        $region16: #{tpu_custom_call.1} parent=11 // pred_fallthru
          _
      $region12: #{tpu_custom_call.1} parent=5 // pred_fallthru
        _
      %p176 = scmp.lt.s32.totalorder %s17, 2
      // Predicated region
      $region17: #{tpu_custom_call.1} parent=5 // pred_check
        %p177 = pneg %p176
      $region18: #{tpu_custom_call.1} parent=5 // pred_check_branch
        %179 = sbr.rel (%p177) target = $region20
      $region19: #{tpu_custom_call.1} parent=5 // pred_region
        // Predicated region
        $region21: #{tpu_custom_call.1} parent=19 // pred_check
          %p180 = pneg %p51
        $region22: #{tpu_custom_call.1} parent=19 // pred_check_branch
          %182 = sbr.rel (%p180) target = $region24
        $region23: #{tpu_custom_call.1} parent=19 // pred_region
          %s183 = smul.u32 8, %s25
          %p184 = scmp.lt.s32.totalorder %s24, 1
          %s185 = scalar_select %p184, %s24, 1
          %p186 = scmp.lt.s32.totalorder %s183, 7
          %s187 = scalar_select %p186, %s183, 7
          %s188 = smul.addr %s185, 8
          %s189 = sadd.s32 %s187, %s188
          %s190 = smul.addr %s189, 8
          %s191 = scalar_lea.vmem %s0, %s190
          %s192 = smul.u32 8, %s25
        $region24: #{tpu_custom_call.1} parent=19 // pred_fallthru
          _
      $region20: #{tpu_custom_call.1} parent=5 // pred_fallthru
        _
      %p193 = scmp.le.s32.totalorder 1, %s17
      %p194 = scmp.lt.s32.totalorder %s17, 3
      %p195 = pnand %p193, %p194
      %p196 = pneg %p195
      // Predicated region
      $region25: #{tpu_custom_call.1} parent=5 // pred_check
        _
      $region26: #{tpu_custom_call.1} parent=5 // pred_check_branch
        %198 = sbr.rel (%p195) target = $region28
      $region27: #{tpu_custom_call.1} parent=5 // pred_region
        %s199 = ssub.s32 %s17, 1
        %s200 = smul.u32 8, %s27
        %p201 = scmp.lt.s32.totalorder %s26, 1
        %s202 = scalar_select %p201, %s26, 1
        %p203 = scmp.lt.s32.totalorder %s200, 7
        %s204 = scalar_select %p203, %s200, 7
        %s205 = smul.addr %s202, 8
        %s206 = sadd.s32 %s204, %s205
        %s207 = smul.addr %s206, 8
        %s208 = scalar_lea.vmem %s0, %s207
        %p209 = pneg %p57
        %p210 = pneg %p54
        %p211 = pneg %p78
        %p212 = pneg %p75
        %p213 = pneg %p106
        %p214 = pneg %p103
        %s215 = sand.u32 %s93, 1
        %s216 = scalar_lea.sflag [#allocation3], %s215
        %s217 = sand.u32 %s93, 1
        %s218 = smul.addr %s217, 64
        %s219 = scalar_lea.vmem [#allocation2], %s218
        %p220 = pneg %p132
        %p221 = pneg %p129
        %s222 = sand.u32 %s22, 1
        %s223 = scalar_lea.sflag [#allocation5], %s222
        %s224 = sand.u32 %s119, 1
        %s225 = scalar_lea.vmem [#allocation4], %s224
        %p226 = pneg %p158
        %p227 = pneg %p155
        %s228 = sand.u32 %s22, 1
        %s229 = scalar_lea.sflag [#allocation5], %s228
        %s230 = sand.u32 %s145, 1
        %s231 = scalar_lea.vmem [#allocation6], %s230
        %s232 = smul.u32 8, %s27
        %p233 = scmp.lt.s32.totalorder %s26, 1
        %s234 = scalar_select %p233, %s26, 1
        %p235 = scmp.lt.s32.totalorder %s232, 7
        %s236 = scalar_select %p235, %s232, 7
        %s237 = smul.addr %s234, 8
        %s238 = sadd.s32 %s236, %s237
        %s239 = smul.addr %s238, 8
        %s240 = scalar_lea.vmem %s0, %s239
        %s241 = smul.u32 8, %s27
        %s242 = smul.u32 8, %s27
        %p243 = scmp.eq.s32.totalorder %s27, 0
        // Predicated region
        $region29: #{tpu_custom_call.1} parent=27 // pred_check
          %p244 = pneg %p243
        $region30: #{tpu_custom_call.1} parent=27 // pred_check_branch
          %246 = sbr.rel (%p244) target = $region32
        $region31: #{tpu_custom_call.1} parent=27 // pred_region
          %247 = vst [vmem:[%s225] sm:$0x1] 0.0
          %248 = vst [vmem:[%s231] sm:$0x1] 0.0
        $region32: #{tpu_custom_call.1} parent=27 // pred_fallthru
          _
        %v249 = vld [vmem:[%s240] sm:$0xff]
        %v250 = vld [vmem:[%s240 + $0x8] sm:$0xff]
        %v251 = vld [vmem:[%s240 + $0x10] sm:$0xff]
        %v252 = vld [vmem:[%s240 + $0x18] sm:$0xff]
        %v253 = vld [vmem:[%s240 + $0x20] sm:$0xff]
        %v254 = vld [vmem:[%s240 + $0x28] sm:$0xff]
        %v255 = vld [vmem:[%s240 + $0x30] sm:$0xff]
        %v256 = vld [vmem:[%s240 + $0x38] sm:$0xff]
        %v257 = vld [vmem:[%s1] sm:$0xff]
        %v258 = vld [vmem:[%s1 + $0x8] sm:$0xff]
        %vm259 = vcmask 130048
        %v261 = vsel %vm259, %v249, 0
        %v264 = vsel %vm259, %v250, 0
        %v267 = vsel %vm259, %v251, 0
        %v270 = vsel %vm259, %v252, 0
        %v273 = vsel %vm259, %v253, 0
        %v276 = vsel %vm259, %v254, 0
        %v279 = vsel %vm259, %v255, 0
        %v282 = vsel %vm259, %v256, 0
        %284 = vmatpush.msra.mxu0 0.0
        %285 = vmatpush.msra.mxu0 0.0
        %286 = vmatpush.msra.mxu0 0.0
        %287 = vmatpush.msra.mxu0 0.0
        %288 = vmatpush.msra.mxu0 0.0
        %289 = vmatpush.msra.mxu0 0.0
        %290 = vmatpush.msra.mxu0 0.0
        %291 = vmatpush.msra.mxu0 0.0
        %292 = vmatpush.msra.mxu0 0.0
        %293 = vmatpush.msra.mxu0 0.0
        %294 = vmatpush.msra.mxu0 0.0
        %295 = vmatpush.msra.mxu0 0.0
        %296 = vmatpush.msra.mxu0 0.0
        %297 = vmatpush.msra.mxu0 0.0
        %298 = vmatpush.msra.mxu0 %v258
        %299 = vmatpush.msra.mxu0 %v257
        %300 = vmatmul.f32.gmra.mxu0 %v261
        %v301 = vpop.f32.mrf.mxu0
        %v302 = vadd.f32 0.0, %v301
        %303 = vmatmul.f32.gmra.mxu0 %v264
        %v304 = vpop.f32.mrf.mxu0
        %v305 = vadd.f32 0.0, %v304
        %306 = vmatmul.f32.gmra.mxu0 %v267
        %v307 = vpop.f32.mrf.mxu0
        %v308 = vadd.f32 0.0, %v307
        %309 = vmatmul.f32.gmra.mxu0 %v270
        %v310 = vpop.f32.mrf.mxu0
        %v311 = vadd.f32 0.0, %v310
        %312 = vmatmul.f32.gmra.mxu0 %v273
        %v313 = vpop.f32.mrf.mxu0
        %v314 = vadd.f32 0.0, %v313
        %315 = vmatmul.f32.gmra.mxu0 %v276
        %v316 = vpop.f32.mrf.mxu0
        %v317 = vadd.f32 0.0, %v316
        %318 = vmatmul.f32.gmra.mxu0 %v279
        %v319 = vpop.f32.mrf.mxu0
        %v320 = vadd.f32 0.0, %v319
        %321 = vmatmul.f32.gmra.mxu0 %v282
        %v322 = vpop.f32.mrf.mxu0
        %v323 = vadd.f32 0.0, %v322
        %324 = vdwg.mxu0
        %325 = vst [vmem:[%s219] sm:$0xff] %v302
        %326 = vst [vmem:[%s219 + $0x8] sm:$0xff] %v305
        %327 = vst [vmem:[%s219 + $0x10] sm:$0xff] %v308
        %328 = vst [vmem:[%s219 + $0x18] sm:$0xff] %v311
        %329 = vst [vmem:[%s219 + $0x20] sm:$0xff] %v314
        %330 = vst [vmem:[%s219 + $0x28] sm:$0xff] %v317
        %331 = vst [vmem:[%s219 + $0x30] sm:$0xff] %v320
        %332 = vst [vmem:[%s219 + $0x38] sm:$0xff] %v323
        %v333 = vld [vmem:[%s225] sm:$0x1]
        %v334 = vadd.f32 %v302, %v305
        %v335 = vadd.f32 %v334, %v308
        %v336 = vadd.f32 %v335, %v311
        %v337 = vadd.f32 %v336, %v314
        %v338 = vadd.f32 %v337, %v317
        %v339 = vadd.f32 %v338, %v320
        %v340 = vadd.f32 %v339, %v323
        %v341 = vrot.slane %v340, 4
        %v342 = vadd.f32 %v340, %v341
        %v343 = vrot.slane %v342, 2
        %v344 = vadd.f32 %v342, %v343
        %v345 = vrot.slane %v344, 1
        %v346 = vadd.f32 %v344, %v345
        %v347 = vadd.f32 %v333, %v346
        %348 = vst [vmem:[%s225] sm:$0x1] %v347
        %v349 = vld [vmem:[%s231] sm:$0x1]
        %v350 = vmul.f32 %v302, %v302
        %v351 = vmul.f32 %v305, %v305
        %v352 = vmul.f32 %v308, %v308
        %v353 = vmul.f32 %v311, %v311
        %v354 = vmul.f32 %v314, %v314
        %v355 = vmul.f32 %v317, %v317
        %v356 = vmul.f32 %v320, %v320
        %v357 = vmul.f32 %v323, %v323
        %v358 = vadd.f32 %v350, %v351
        %v359 = vadd.f32 %v358, %v352
        %v360 = vadd.f32 %v359, %v353
        %v361 = vadd.f32 %v360, %v354
        %v362 = vadd.f32 %v361, %v355
        %v363 = vadd.f32 %v362, %v356
        %v364 = vadd.f32 %v363, %v357
        %v365 = vrot.slane %v364, 4
        %v366 = vadd.f32 %v364, %v365
        %v367 = vrot.slane %v366, 2
        %v368 = vadd.f32 %v366, %v367
        %v369 = vrot.slane %v368, 1
        %v370 = vadd.f32 %v368, %v369
        %v371 = vadd.f32 %v349, %v370
        %372 = vst [vmem:[%s231] sm:$0x1] %v371
        %s373 = sand.u32 %s93, 1
        %s374 = scalar_lea.sflag [#allocation3], %s373
        %s375 = sand.u32 %s93, 1
        %s376 = smul.addr %s375, 64
        %s377 = scalar_lea.vmem [#allocation2], %s376
        %s378 = sand.u32 %s22, 1
        %s379 = scalar_lea.sflag [#allocation5], %s378
        %s380 = sand.u32 %s119, 1
        %s381 = scalar_lea.vmem [#allocation4], %s380
        %s382 = sand.u32 %s22, 1
        %s383 = scalar_lea.sflag [#allocation5], %s382
        %s384 = sand.u32 %s145, 1
        %s385 = scalar_lea.vmem [#allocation6], %s384
        // Predicated region
        $region33: #{tpu_custom_call.1} parent=27 // pred_check
          %p386 = pneg %p103
        $region34: #{tpu_custom_call.1} parent=27 // pred_check_branch
          %388 = sbr.rel (%p386) target = $region36
        $region35: #{tpu_custom_call.1} parent=27 // pred_region
          %s389 = smul.u32 8, %s27
          %391 = vsyncadd %s374, 0
          %s392 = smul.addr %s26, 8
          %s393 = sadd.s32 %s389, %s392
          %s394 = smul.addr %s393, 8
          %s395 = scalar_lea.hbm %s2, %s394
          %s396 = sshll.u32 %s377, 4
          %s397 = int_to_ptr.vmem [resolvable:$true] %s396
          %s398 = sshll.u32 %s395, 4
          %s399 = int_to_ptr.hbm [resolvable:$true] %s398
          %404 = dma.vmem_to_hbm [thread:$0]  %s397, 1024, %s399, %s374, 128, 128, 8
        $region36: #{tpu_custom_call.1} parent=27 // pred_fallthru
          _
        // Predicated region
        $region37: #{tpu_custom_call.1} parent=27 // pred_check
          %p405 = pneg %p129
        $region38: #{tpu_custom_call.1} parent=27 // pred_check_branch
          %407 = sbr.rel (%p405) target = $region40
        $region39: #{tpu_custom_call.1} parent=27 // pred_region
          %409 = vsyncadd %s379, 0
          %s410 = scalar_lea.hbm %s3, %s26
          %s412 = sshll.u32 %s381, 4
          %s413 = int_to_ptr.vmem [resolvable:$true] %s412
          %s414 = sshll.u32 %s410, 4
          %s415 = int_to_ptr.hbm [resolvable:$true] %s414
          %417 = dma.vmem_to_hbm [thread:$0]  %s413, 16, %s415, %s379
        $region40: #{tpu_custom_call.1} parent=27 // pred_fallthru
          _
        // Predicated region
        $region41: #{tpu_custom_call.1} parent=27 // pred_check
          %p418 = pneg %p155
        $region42: #{tpu_custom_call.1} parent=27 // pred_check_branch
          %420 = sbr.rel (%p418) target = $region44
        $region43: #{tpu_custom_call.1} parent=27 // pred_region
          %422 = vsyncadd %s383, 0
          %s423 = scalar_lea.hbm %s4, %s26
          %s425 = sshll.u32 %s385, 4
          %s426 = int_to_ptr.vmem [resolvable:$true] %s425
          %s427 = sshll.u32 %s423, 4
          %s428 = int_to_ptr.hbm [resolvable:$true] %s427
          %430 = dma.vmem_to_hbm [thread:$0]  %s426, 16, %s428, %s383
        $region44: #{tpu_custom_call.1} parent=27 // pred_fallthru
          _
      $region28: #{tpu_custom_call.1} parent=5 // pred_fallthru
        _
      %p431 = scmp.le.s32.totalorder 2, %s17
      // Predicated region
      $region45: #{tpu_custom_call.1} parent=5 // pred_check
        %p432 = pneg %p431
      $region46: #{tpu_custom_call.1} parent=5 // pred_check_branch
        %434 = sbr.rel (%p432) target = $region48
      $region47: #{tpu_custom_call.1} parent=5 // pred_region
        %s435 = ssub.s32 %s17, 2
        // Predicated region
        $region49: #{tpu_custom_call.1} parent=47 // pred_check
          %p436 = pneg %p109
        $region50: #{tpu_custom_call.1} parent=47 // pred_check_branch
          %438 = sbr.rel (%p436) target = $region52
        $region51: #{tpu_custom_call.1} parent=47 // pred_region
          %s439 = sand.u32 %s94, 1
          %s440 = scalar_lea.sflag [#allocation3], %s439
          %s441 = sand.u32 %s94, 1
          %s442 = smul.addr %s441, 64
          %s443 = scalar_lea.vmem [#allocation2], %s442
          %445 = dma.done %s440, 1024
        $region52: #{tpu_custom_call.1} parent=47 // pred_fallthru
          _
        // Predicated region
        $region53: #{tpu_custom_call.1} parent=47 // pred_check
          %p446 = pneg %p135
        $region54: #{tpu_custom_call.1} parent=47 // pred_check_branch
          %448 = sbr.rel (%p446) target = $region56
        $region55: #{tpu_custom_call.1} parent=47 // pred_region
          %s449 = sand.u32 %s23, 1
          %s450 = scalar_lea.sflag [#allocation5], %s449
          %s451 = sand.u32 %s120, 1
          %s452 = scalar_lea.vmem [#allocation4], %s451
          %454 = dma.done %s450, 16
        $region56: #{tpu_custom_call.1} parent=47 // pred_fallthru
          _
        // Predicated region
        $region57: #{tpu_custom_call.1} parent=47 // pred_check
          %p455 = pneg %p161
        $region58: #{tpu_custom_call.1} parent=47 // pred_check_branch
          %457 = sbr.rel (%p455) target = $region60
        $region59: #{tpu_custom_call.1} parent=47 // pred_region
          %s458 = sand.u32 %s23, 1
          %s459 = scalar_lea.sflag [#allocation5], %s458
          %s460 = sand.u32 %s146, 1
          %s461 = scalar_lea.vmem [#allocation6], %s460
          %463 = dma.done %s459, 16
        $region60: #{tpu_custom_call.1} parent=47 // pred_fallthru
          _
      $region48: #{tpu_custom_call.1} parent=5 // pred_fallthru
        _
    $region6: #{tpu_custom_call.1} parent=1 // loop_footer
      %s21 = sadd.s32 1, %s17
    $region7: #{tpu_custom_call.1} parent=1 // loop_footer_branch
      %16 = sbr.rel target = $region3
    $region8: #{tpu_custom_call.1} parent=1 // loop_exit
      _
    %464 = vsyncpa [#allocation3], 1
    %s465 = scalar_lea.sflag [#allocation3], 1
    %466 = vsyncpa %s465, 1
    %467 = vsyncpa [#allocation5], 1
    %s468 = scalar_lea.sflag [#allocation5], 1
    %469 = vsyncpa %s468, 1

</llo_original>
